<compile_context>
chip_gen: v6e
topology: v6e:2x2x1
jax: 0.10.0
libtpu: 0.0.40
codegen_flags: <defaults>
</compile_context>

<pallas_src>
import functools

import jax
import jax.numpy as jnp
from jax.experimental import pallas as pl
from jax.experimental.pallas import tpu as pltpu


def _sk_basic_block_kernel(patch_ref, w_ref, b_ref, pool_ref, fcw_ref, fcb_ref,
                           fcsw_ref, fcsb_ref, bns_ref, bnb_ref, out_ref):
    """Whole batch in one invocation; channels on sublanes, pixels on lanes.

    patch_ref : (9*C, B*HW)  bf16  im2col of the zero-padded input
    w_ref     : (3*P, 9*C)   bf16  all three branch conv weights fused
    b_ref     : (3*P, 1)     f32   fused conv biases
    pool_ref  : (B*HW, B)    f32   per-batch average-pool matrix (1/HW blocks)
    fcw_ref   : (d, P)       f32   SK fc weight
    fcb_ref   : (d, 1)       f32
    fcsw_ref  : (3*P, d)     f32   the three fcs layers fused
    fcsb_ref  : (3*P, 1)     f32
    bns/bnb   : (P, 1)       f32   folded inference BatchNorm scale / shift
    out_ref   : (B, P, HW)   f32   NCHW-flattened output (lane-dense)
    """
    Bv, P, HW = out_ref.shape

    # One MXU matmul for all 3 branches / 9 taps (K = 9*C), f32 accumulate.
    feas = jnp.dot(w_ref[...], patch_ref[...],
                   preferred_element_type=jnp.float32)            # (3P, B*HW)
    feas = jnp.maximum(feas + b_ref[...], 0.0)                    # fused ReLU

    # Global average pool per batch element via one small matmul -> (3P, B).
    fea_s_br = jnp.dot(feas, pool_ref[...],
                       preferred_element_type=jnp.float32)
    fea_s = fea_s_br[0:P] + fea_s_br[P:2 * P] + fea_s_br[2 * P:3 * P]  # (P, B)

    # SK fc, then the three fcs layers as one fused (3P, d) matmul.
    fea_z = jnp.dot(fcw_ref[...], fea_s,
                    preferred_element_type=jnp.float32) + fcb_ref[...]    # (d, B)
    logits = jnp.dot(fcsw_ref[...], fea_z,
                     preferred_element_type=jnp.float32) + fcsb_ref[...]  # (3P, B)

    # Softmax over the M=3 branch axis (row blocks of size P).
    l0, l1, l2 = logits[0:P], logits[P:2 * P], logits[2 * P:3 * P]
    mx = jnp.maximum(jnp.maximum(l0, l1), l2)
    e0 = jnp.exp(l0 - mx)
    e1 = jnp.exp(l1 - mx)
    e2 = jnp.exp(l2 - mx)
    inv = pl.reciprocal(e0 + e1 + e2, approx=True)                # EUP slot
    a0, a1, a2 = e0 * inv, e1 * inv, e2 * inv                     # (P, B)

    scale = bns_ref[...]
    shift = bnb_ref[...]
    for b in range(Bv):                                           # static, B small
        lo, hi = b * HW, (b + 1) * HW
        fea_v = (a0[:, b:b + 1] * feas[0:P, lo:hi]
                 + a1[:, b:b + 1] * feas[P:2 * P, lo:hi]
                 + a2[:, b:b + 1] * feas[2 * P:3 * P, lo:hi])     # (P, HW)
        out_ref[b] = jax.nn.sigmoid(fea_v * scale + shift)


def _full_spec(shape):
    n = len(shape)
    return pl.BlockSpec(shape, lambda i, n=n: (0,) * n)


def _dense_from_grouped(w_g, C, P, G):
    """PyTorch grouped conv weight (P, C//G, kH, kW) -> dense block-diagonal
    (P, C, kH, kW) so groups=G conv becomes a plain matmul."""
    _, cin_g, kh, kw = w_g.shape
    cout_g = P // G
    out = jnp.zeros((P, C, kh, kw), jnp.float32)
    for g in range(G):
        out = out.at[g * cout_g:(g + 1) * cout_g,
                     g * cin_g:(g + 1) * cin_g].set(
            w_g[g * cout_g:(g + 1) * cout_g])
    return out


@functools.partial(jax.jit, static_argnames=("groups",))
def basic_block2_forward(x_nchw, params, *, groups):
    B, C, H, W = x_nchw.shape
    P = params["b33"].shape[0]
    G = groups
    HW = H * W
    eps = 1e-5
    assert C % G == 0 and P % G == 0, "grouped conv requires C%G==0 and P%G==0"

    x = x_nchw.astype(jnp.float32)

    # --- im2col on the wrapper/XLA side: (9*C, B*HW), pixels on the lane axis.
    xp = jnp.pad(x, ((0, 0), (0, 0), (1, 1), (1, 1)))
    taps = [xp[:, :, kh:kh + H, kw:kw + W]                 # (B, C, H, W)
            for kh in range(3) for kw in range(3)]
    patch = jnp.stack(taps, axis=0)                        # (9, B, C, H, W)
    patch = jnp.transpose(patch, (0, 2, 1, 3, 4)).reshape(9 * C, B * HW)
    patch = patch.astype(jnp.bfloat16)                     # bf16 MXU operand

    # --- fuse the three branch conv weights into one (3P, 9C) matrix:
    #     3x3 fills all taps, (3,1) only the kw=1 column, 1x1 only the centre.
    wd33 = _dense_from_grouped(params["w33"], C, P, G)                 # (P,C,3,3)
    wd31 = jnp.zeros((P, C, 3, 3), jnp.float32).at[:, :, :, 1:2].set(
        _dense_from_grouped(params["w31"], C, P, G))
    wd11 = jnp.zeros((P, C, 3, 3), jnp.float32).at[:, :, 1:2, 1:2].set(
        _dense_from_grouped(params["w11"], C, P, G))
    wd = jnp.stack([wd33, wd31, wd11], axis=0)                         # (3,P,C,3,3)
    w_all = jnp.transpose(wd, (0, 1, 3, 4, 2)).reshape(3 * P, 9 * C)
    w_all = w_all.astype(jnp.bfloat16)                                 # bf16 MXU operand
    b_all = jnp.concatenate([params["b33"], params["b31"],
                             params["b11"]]).reshape(3 * P, 1)

    # Per-batch global-average-pool matrix (B*HW, B).
    pool_mat = jnp.repeat(jnp.eye(B, dtype=jnp.float32), HW, axis=0) / HW

    fcw = params["fc_w"]                                               # (d, P)
    fcb = params["fc_b"].reshape(-1, 1)                                # (d, 1)
    fcsw = params["fcs_w"].reshape(3 * P, -1)                          # (3P, d)
    fcsb = params["fcs_b"].reshape(3 * P, 1)

    # TODO(synk): training-mode BN (batch statistics) not implemented; running
    #             stats are folded into a per-channel affine (eval semantics).
    scale = params["bn_gamma"] / jnp.sqrt(params["bn_var"] + eps)
    shift = params["bn_beta"] - params["bn_mean"] * scale
    bns, bnb = scale.reshape(P, 1), shift.reshape(P, 1)

    args = (patch, w_all, b_all, pool_mat, fcw, fcb, fcsw, fcsb, bns, bnb)

    out = pl.pallas_call(
        _sk_basic_block_kernel,
        out_shape=jax.ShapeDtypeStruct((B, P, HW), jnp.float32),
        grid_spec=pltpu.PrefetchScalarGridSpec(
            num_scalar_prefetch=0,
            grid=(1,),                                  # whole batch in one step
            in_specs=[_full_spec(a.shape) for a in args],
            out_specs=_full_spec((B, P, HW)),
        ),
        compiler_params=pltpu.CompilerParams(
            dimension_semantics=("arbitrary",)),
    )(*args)
    return out.reshape(B, P, H, W)                      # already NCHW, no transpose


def _reference_forward(x, params, *, groups):
    """Pure-JAX f32 reference of BasicBlock2.forward (eval-mode BN)."""
    G = groups
    eps = 1e-5

    def gconv(x, w, b, pad):
        y = jax.lax.conv_general_dilated(
            x, w, window_strides=(1, 1), padding=pad,
            dimension_numbers=("NCHW", "OIHW", "NCHW"),
            feature_group_count=G)
        return jax.nn.relu(y + b[None, :, None, None])

    f1 = gconv(x, params["w33"], params["b33"], ((1, 1), (1, 1)))
    f2 = gconv(x, params["w31"], params["b31"], ((1, 1), (0, 0)))
    f3 = gconv(x, params["w11"], params["b11"], ((0, 0), (0, 0)))
    feas = jnp.stack([f1, f2, f3], axis=1)                         # [B,M,P,H,W]
    fea_u = feas.sum(axis=1)
    fea_s = fea_u.mean(axis=(-1, -2))
    fea_z = fea_s @ params["fc_w"].T + params["fc_b"]
    logits = jnp.stack([fea_z @ params["fcs_w"][m].T + params["fcs_b"][m]
                        for m in range(3)], axis=1)
    attn = jax.nn.softmax(logits, axis=1)
    fea_v = (feas * attn[..., None, None]).sum(axis=1)
    scale = params["bn_gamma"] / jnp.sqrt(params["bn_var"] + eps)
    shift = params["bn_beta"] - params["bn_mean"] * scale
    return jax.nn.sigmoid(fea_v * scale[None, :, None, None]
                          + shift[None, :, None, None])


if __name__ == "__main__":
    key = jax.random.PRNGKey(0)
    B, C, H, W = 2, 16, 16, 16          # in_planes = 16
    P, G, M = 16, 8, 3                  # planes = 16, groups = 8, M = 3
    d = max(C // 2, 32)                 # SKConv: d = max(features / r, L) = 32

    keys = jax.random.split(key, 15)
    params = {
        "w33": 0.1 * jax.random.normal(keys[0], (P, C // G, 3, 3), jnp.float32),
        "b33": 0.1 * jax.random.normal(keys[1], (P,), jnp.float32),
        "w31": 0.1 * jax.random.normal(keys[2], (P, C // G, 3, 1), jnp.float32),
        "b31": 0.1 * jax.random.normal(keys[3], (P,), jnp.float32),
        "w11": 0.1 * jax.random.normal(keys[4], (P, C // G, 1, 1), jnp.float32),
        "b11": 0.1 * jax.random.normal(keys[5], (P,), jnp.float32),
        "fc_w": 0.1 * jax.random.normal(keys[6], (d, P), jnp.float32),
        "fc_b": 0.1 * jax.random.normal(keys[7], (d,), jnp.float32),
        "fcs_w": 0.1 * jax.random.normal(keys[8], (M, P, d), jnp.float32),
        "fcs_b": 0.1 * jax.random.normal(keys[9], (M, P), jnp.float32),
        "bn_gamma": 1.0 + 0.1 * jax.random.normal(keys[10], (P,), jnp.float32),
        "bn_beta": 0.1 * jax.random.normal(keys[11], (P,), jnp.float32),
        "bn_mean": 0.1 * jax.random.normal(keys[12], (P,), jnp.float32),
        "bn_var": 0.5 + jnp.abs(jax.random.normal(keys[13], (P,), jnp.float32)),
    }
    x = jax.random.normal(keys[14], (B, C, H, W), jnp.float32)

    out = jax.block_until_ready(basic_block2_forward(x, params, groups=G))
    ref = _reference_forward(x, params, groups=G)

    assert out.shape == (B, P, H, W)
    # Tolerance accounts for bf16 MXU operands on the fused conv matmul
    # (f32 accumulation); observed error is ~1e-3, bound set at 1e-2.
    assert float(jnp.max(jnp.abs(out - ref))) < 1e-2
    print("KERNEL_OK")
</pallas_src>

<mosaic_0001>
module attributes {stable_mosaic.version = 11 : i64} {
  func.func @_sk_basic_block_kernel(%arg0: i32, %arg1: memref<144x512xbf16, #tpu.memory_space<vmem>>, %arg2: memref<48x144xbf16, #tpu.memory_space<vmem>>, %arg3: memref<48x1xf32, #tpu.memory_space<vmem>>, %arg4: memref<512x2xf32, #tpu.memory_space<vmem>>, %arg5: memref<32x16xf32, #tpu.memory_space<vmem>>, %arg6: memref<32x1xf32, #tpu.memory_space<vmem>>, %arg7: memref<48x32xf32, #tpu.memory_space<vmem>>, %arg8: memref<48x1xf32, #tpu.memory_space<vmem>>, %arg9: memref<16x1xf32, #tpu.memory_space<vmem>>, %arg10: memref<16x1xf32, #tpu.memory_space<vmem>>, %arg11: memref<2x16x256xf32, #tpu.memory_space<vmem>>) attributes {dimension_semantics = [#tpu.dimension_semantics<arbitrary>], iteration_bounds = array<i64: 1>, scalar_prefetch = 0 : i64, scratch_operands = 0 : i64, tpu.core_type = #tpu.core_type<tc>, window_params = [{pipeline_mode = #tpu.pipeline_mode<synchronous>, transform_indices = @transform_0, window_bounds = array<i64: 144, 512>}, {pipeline_mode = #tpu.pipeline_mode<synchronous>, transform_indices = @transform_1, window_bounds = array<i64: 48, 144>}, {pipeline_mode = #tpu.pipeline_mode<synchronous>, transform_indices = @transform_2, window_bounds = array<i64: 48, 1>}, {pipeline_mode = #tpu.pipeline_mode<synchronous>, transform_indices = @transform_3, window_bounds = array<i64: 512, 2>}, {pipeline_mode = #tpu.pipeline_mode<synchronous>, transform_indices = @transform_4, window_bounds = array<i64: 32, 16>}, {pipeline_mode = #tpu.pipeline_mode<synchronous>, transform_indices = @transform_5, window_bounds = array<i64: 32, 1>}, {pipeline_mode = #tpu.pipeline_mode<synchronous>, transform_indices = @transform_6, window_bounds = array<i64: 48, 32>}, {pipeline_mode = #tpu.pipeline_mode<synchronous>, transform_indices = @transform_7, window_bounds = array<i64: 48, 1>}, {pipeline_mode = #tpu.pipeline_mode<synchronous>, transform_indices = @transform_8, window_bounds = array<i64: 16, 1>}, {pipeline_mode = #tpu.pipeline_mode<synchronous>, transform_indices = @transform_9, window_bounds = array<i64: 16, 1>}, {pipeline_mode = #tpu.pipeline_mode<synchronous>, transform_indices = @transform_10, window_bounds = array<i64: 2, 16, 256>}]} {
    %c0 = arith.constant 0 : index
    %c0_0 = arith.constant 0 : index
    %0 = vector.load %arg2[%c0, %c0_0] : memref<48x144xbf16, #tpu.memory_space<vmem>>, vector<48x144xbf16>
    %c0_1 = arith.constant 0 : index
    %c0_2 = arith.constant 0 : index
    %1 = vector.load %arg1[%c0_1, %c0_2] : memref<144x512xbf16, #tpu.memory_space<vmem>>, vector<144x512xbf16>
    %cst = arith.constant dense<0.000000e+00> : vector<48x512xf32>
    %2 = tpu.matmul %0, %1, %cst {dimension_numbers = #tpu.dot_dimension_numbers<[1], [0], [0], [1], [0, 0, 1, 1], [], []>} : vector<48x144xbf16>, vector<144x512xbf16>, vector<48x512xf32> -> vector<48x512xf32>
    %c0_3 = arith.constant 0 : index
    %c0_4 = arith.constant 0 : index
    %3 = vector.load %arg3[%c0_3, %c0_4] : memref<48x1xf32, #tpu.memory_space<vmem>>, vector<48x1xf32>
    %4 = vector.broadcast %3 : vector<48x1xf32> to vector<48x512xf32>
    %5 = arith.addf %2, %4 : vector<48x512xf32>
    %cst_5 = arith.constant 0.000000e+00 : f32
    %6 = vector.broadcast %cst_5 : f32 to vector<48x512xf32>
    %7 = arith.maximumf %5, %6 : vector<48x512xf32>
    %c0_6 = arith.constant 0 : index
    %c0_7 = arith.constant 0 : index
    %8 = vector.load %arg4[%c0_6, %c0_7] : memref<512x2xf32, #tpu.memory_space<vmem>>, vector<512x2xf32>
    %cst_8 = arith.constant dense<0.000000e+00> : vector<48x2xf32>
    %9 = tpu.matmul %7, %8, %cst_8 {dimension_numbers = #tpu.dot_dimension_numbers<[1], [0], [0], [1], [0, 0, 1, 1], [], []>} : vector<48x512xf32>, vector<512x2xf32>, vector<48x2xf32> -> vector<48x2xf32>
    %10 = vector.extract_strided_slice %9 {offsets = [0, 0], sizes = [16, 2], strides = [1, 1]} : vector<48x2xf32> to vector<16x2xf32>
    %11 = vector.extract_strided_slice %9 {offsets = [16, 0], sizes = [16, 2], strides = [1, 1]} : vector<48x2xf32> to vector<16x2xf32>
    %12 = arith.addf %10, %11 : vector<16x2xf32>
    %13 = vector.extract_strided_slice %9 {offsets = [32, 0], sizes = [16, 2], strides = [1, 1]} : vector<48x2xf32> to vector<16x2xf32>
    %14 = arith.addf %12, %13 : vector<16x2xf32>
    %c0_9 = arith.constant 0 : index
    %c0_10 = arith.constant 0 : index
    %15 = vector.load %arg5[%c0_9, %c0_10] : memref<32x16xf32, #tpu.memory_space<vmem>>, vector<32x16xf32>
    %cst_11 = arith.constant dense<0.000000e+00> : vector<32x2xf32>
    %16 = tpu.matmul %15, %14, %cst_11 {dimension_numbers = #tpu.dot_dimension_numbers<[1], [0], [0], [1], [0, 0, 1, 1], [], []>} : vector<32x16xf32>, vector<16x2xf32>, vector<32x2xf32> -> vector<32x2xf32>
    %c0_12 = arith.constant 0 : index
    %c0_13 = arith.constant 0 : index
    %17 = vector.load %arg6[%c0_12, %c0_13] : memref<32x1xf32, #tpu.memory_space<vmem>>, vector<32x1xf32>
    %18 = vector.broadcast %17 : vector<32x1xf32> to vector<32x2xf32>
    %19 = arith.addf %16, %18 : vector<32x2xf32>
    %c0_14 = arith.constant 0 : index
    %c0_15 = arith.constant 0 : index
    %20 = vector.load %arg7[%c0_14, %c0_15] : memref<48x32xf32, #tpu.memory_space<vmem>>, vector<48x32xf32>
    %cst_16 = arith.constant dense<0.000000e+00> : vector<48x2xf32>
    %21 = tpu.matmul %20, %19, %cst_16 {dimension_numbers = #tpu.dot_dimension_numbers<[1], [0], [0], [1], [0, 0, 1, 1], [], []>} : vector<48x32xf32>, vector<32x2xf32>, vector<48x2xf32> -> vector<48x2xf32>
    %c0_17 = arith.constant 0 : index
    %c0_18 = arith.constant 0 : index
    %22 = vector.load %arg8[%c0_17, %c0_18] : memref<48x1xf32, #tpu.memory_space<vmem>>, vector<48x1xf32>
    %23 = vector.broadcast %22 : vector<48x1xf32> to vector<48x2xf32>
    %24 = arith.addf %21, %23 : vector<48x2xf32>
    %25 = vector.extract_strided_slice %24 {offsets = [0, 0], sizes = [16, 2], strides = [1, 1]} : vector<48x2xf32> to vector<16x2xf32>
    %26 = vector.extract_strided_slice %24 {offsets = [16, 0], sizes = [16, 2], strides = [1, 1]} : vector<48x2xf32> to vector<16x2xf32>
    %27 = vector.extract_strided_slice %24 {offsets = [32, 0], sizes = [16, 2], strides = [1, 1]} : vector<48x2xf32> to vector<16x2xf32>
    %28 = arith.maximumf %25, %26 : vector<16x2xf32>
    %29 = arith.maximumf %28, %27 : vector<16x2xf32>
    %30 = arith.subf %25, %29 : vector<16x2xf32>
    %31 = math.exp %30 : vector<16x2xf32>
    %32 = arith.subf %26, %29 : vector<16x2xf32>
    %33 = math.exp %32 : vector<16x2xf32>
    %34 = arith.subf %27, %29 : vector<16x2xf32>
    %35 = math.exp %34 : vector<16x2xf32>
    %36 = arith.addf %31, %33 : vector<16x2xf32>
    %37 = arith.addf %36, %35 : vector<16x2xf32>
    %38 = tpu.reciprocal %37 {approx = true} : vector<16x2xf32> -> vector<16x2xf32>
    %39 = arith.mulf %31, %38 : vector<16x2xf32>
    %40 = arith.mulf %33, %38 : vector<16x2xf32>
    %41 = arith.mulf %35, %38 : vector<16x2xf32>
    %c0_19 = arith.constant 0 : index
    %c0_20 = arith.constant 0 : index
    %42 = vector.load %arg9[%c0_19, %c0_20] : memref<16x1xf32, #tpu.memory_space<vmem>>, vector<16x1xf32>
    %c0_21 = arith.constant 0 : index
    %c0_22 = arith.constant 0 : index
    %43 = vector.load %arg10[%c0_21, %c0_22] : memref<16x1xf32, #tpu.memory_space<vmem>>, vector<16x1xf32>
    %44 = vector.extract_strided_slice %39 {offsets = [0, 0], sizes = [16, 1], strides = [1, 1]} : vector<16x2xf32> to vector<16x1xf32>
    %45 = vector.extract_strided_slice %7 {offsets = [0, 0], sizes = [16, 256], strides = [1, 1]} : vector<48x512xf32> to vector<16x256xf32>
    %46 = vector.broadcast %44 : vector<16x1xf32> to vector<16x256xf32>
    %47 = arith.mulf %46, %45 : vector<16x256xf32>
    %48 = vector.extract_strided_slice %40 {offsets = [0, 0], sizes = [16, 1], strides = [1, 1]} : vector<16x2xf32> to vector<16x1xf32>
    %49 = vector.extract_strided_slice %7 {offsets = [16, 0], sizes = [16, 256], strides = [1, 1]} : vector<48x512xf32> to vector<16x256xf32>
    %50 = vector.broadcast %48 : vector<16x1xf32> to vector<16x256xf32>
    %51 = arith.mulf %50, %49 : vector<16x256xf32>
    %52 = arith.addf %47, %51 : vector<16x256xf32>
    %53 = vector.extract_strided_slice %41 {offsets = [0, 0], sizes = [16, 1], strides = [1, 1]} : vector<16x2xf32> to vector<16x1xf32>
    %54 = vector.extract_strided_slice %7 {offsets = [32, 0], sizes = [16, 256], strides = [1, 1]} : vector<48x512xf32> to vector<16x256xf32>
    %55 = vector.broadcast %53 : vector<16x1xf32> to vector<16x256xf32>
    %56 = arith.mulf %55, %54 : vector<16x256xf32>
    %57 = arith.addf %52, %56 : vector<16x256xf32>
    %58 = vector.broadcast %42 : vector<16x1xf32> to vector<16x256xf32>
    %59 = arith.mulf %57, %58 : vector<16x256xf32>
    %60 = vector.broadcast %43 : vector<16x1xf32> to vector<16x256xf32>
    %61 = arith.addf %59, %60 : vector<16x256xf32>
    %62 = arith.negf %61 : vector<16x256xf32>
    %63 = math.exp %62 : vector<16x256xf32>
    %cst_23 = arith.constant 1.000000e+00 : f32
    %64 = vector.broadcast %cst_23 : f32 to vector<16x256xf32>
    %65 = arith.addf %64, %63 : vector<16x256xf32>
    %66 = arith.divf %64, %65 : vector<16x256xf32>
    %c0_24 = arith.constant 0 : index
    %c0_25 = arith.constant 0 : index
    %c0_26 = arith.constant 0 : index
    %67 = vector.load %arg11[%c0_24, %c0_25, %c0_26] : memref<2x16x256xf32, #tpu.memory_space<vmem>>, vector<1x16x256xf32>
    %68 = vector.shape_cast %67 : vector<1x16x256xf32> to vector<16x256xf32>
    %69 = vector.shape_cast %66 : vector<16x256xf32> to vector<1x16x256xf32>
    tpu.vector_store %arg11[%c0_24, %c0_25, %c0_26], %69 {strides = array<i32>} : memref<2x16x256xf32, #tpu.memory_space<vmem>>, vector<1x16x256xf32>,
    %70 = vector.extract_strided_slice %39 {offsets = [0, 1], sizes = [16, 1], strides = [1, 1]} : vector<16x2xf32> to vector<16x1xf32>
    %71 = vector.extract_strided_slice %7 {offsets = [0, 256], sizes = [16, 256], strides = [1, 1]} : vector<48x512xf32> to vector<16x256xf32>
    %72 = vector.broadcast %70 : vector<16x1xf32> to vector<16x256xf32>
    %73 = arith.mulf %72, %71 : vector<16x256xf32>
    %74 = vector.extract_strided_slice %40 {offsets = [0, 1], sizes = [16, 1], strides = [1, 1]} : vector<16x2xf32> to vector<16x1xf32>
    %75 = vector.extract_strided_slice %7 {offsets = [16, 256], sizes = [16, 256], strides = [1, 1]} : vector<48x512xf32> to vector<16x256xf32>
    %76 = vector.broadcast %74 : vector<16x1xf32> to vector<16x256xf32>
    %77 = arith.mulf %76, %75 : vector<16x256xf32>
    %78 = arith.addf %73, %77 : vector<16x256xf32>
    %79 = vector.extract_strided_slice %41 {offsets = [0, 1], sizes = [16, 1], strides = [1, 1]} : vector<16x2xf32> to vector<16x1xf32>
    %80 = vector.extract_strided_slice %7 {offsets = [32, 256], sizes = [16, 256], strides = [1, 1]} : vector<48x512xf32> to vector<16x256xf32>
    %81 = vector.broadcast %79 : vector<16x1xf32> to vector<16x256xf32>
    %82 = arith.mulf %81, %80 : vector<16x256xf32>
    %83 = arith.addf %78, %82 : vector<16x256xf32>
    %84 = vector.broadcast %42 : vector<16x1xf32> to vector<16x256xf32>
    %85 = arith.mulf %83, %84 : vector<16x256xf32>
    %86 = vector.broadcast %43 : vector<16x1xf32> to vector<16x256xf32>
    %87 = arith.addf %85, %86 : vector<16x256xf32>
    %88 = arith.negf %87 : vector<16x256xf32>
    %89 = math.exp %88 : vector<16x256xf32>
    %cst_27 = arith.constant 1.000000e+00 : f32
    %90 = vector.broadcast %cst_27 : f32 to vector<16x256xf32>
    %91 = arith.addf %90, %89 : vector<16x256xf32>
    %92 = arith.divf %90, %91 : vector<16x256xf32>
    %c1 = arith.constant 1 : index
    %c0_28 = arith.constant 0 : index
    %c0_29 = arith.constant 0 : index
    %93 = vector.load %arg11[%c1, %c0_28, %c0_29] : memref<2x16x256xf32, #tpu.memory_space<vmem>>, vector<1x16x256xf32>
    %94 = vector.shape_cast %93 : vector<1x16x256xf32> to vector<16x256xf32>
    %95 = vector.shape_cast %92 : vector<16x256xf32> to vector<1x16x256xf32>
    tpu.vector_store %arg11[%c1, %c0_28, %c0_29], %95 {strides = array<i32>} : memref<2x16x256xf32, #tpu.memory_space<vmem>>, vector<1x16x256xf32>,
    return
  }
  func.func @transform_0(%arg0: i32) -> (i32, i32) {
    %c0_i32 = arith.constant 0 : i32
    %c0_i32_0 = arith.constant 0 : i32
    %c0_i32_1 = arith.constant 0 : i32
    return %c0_i32, %c0_i32_0 : i32, i32
  }
  func.func @transform_1(%arg0: i32) -> (i32, i32) {
    %c0_i32 = arith.constant 0 : i32
    %c0_i32_0 = arith.constant 0 : i32
    %c0_i32_1 = arith.constant 0 : i32
    return %c0_i32, %c0_i32_0 : i32, i32
  }
  func.func @transform_2(%arg0: i32) -> (i32, i32) {
    %c0_i32 = arith.constant 0 : i32
    %c0_i32_0 = arith.constant 0 : i32
    %c0_i32_1 = arith.constant 0 : i32
    return %c0_i32, %c0_i32_0 : i32, i32
  }
  func.func @transform_3(%arg0: i32) -> (i32, i32) {
    %c0_i32 = arith.constant 0 : i32
    %c0_i32_0 = arith.constant 0 : i32
    %c0_i32_1 = arith.constant 0 : i32
    return %c0_i32, %c0_i32_0 : i32, i32
  }
  func.func @transform_4(%arg0: i32) -> (i32, i32) {
    %c0_i32 = arith.constant 0 : i32
    %c0_i32_0 = arith.constant 0 : i32
    %c0_i32_1 = arith.constant 0 : i32
    return %c0_i32, %c0_i32_0 : i32, i32
  }
  func.func @transform_5(%arg0: i32) -> (i32, i32) {
    %c0_i32 = arith.constant 0 : i32
    %c0_i32_0 = arith.constant 0 : i32
    %c0_i32_1 = arith.constant 0 : i32
    return %c0_i32, %c0_i32_0 : i32, i32
  }
  func.func @transform_6(%arg0: i32) -> (i32, i32) {
    %c0_i32 = arith.constant 0 : i32
    %c0_i32_0 = arith.constant 0 : i32
    %c0_i32_1 = arith.constant 0 : i32
    return %c0_i32, %c0_i32_0 : i32, i32
  }
  func.func @transform_7(%arg0: i32) -> (i32, i32) {
    %c0_i32 = arith.constant 0 : i32
    %c0_i32_0 = arith.constant 0 : i32
    %c0_i32_1 = arith.constant 0 : i32
    return %c0_i32, %c0_i32_0 : i32, i32
  }
  func.func @transform_8(%arg0: i32) -> (i32, i32) {
    %c0_i32 = arith.constant 0 : i32
    %c0_i32_0 = arith.constant 0 : i32
    %c0_i32_1 = arith.constant 0 : i32
    return %c0_i32, %c0_i32_0 : i32, i32
  }
  func.func @transform_9(%arg0: i32) -> (i32, i32) {
    %c0_i32 = arith.constant 0 : i32
    %c0_i32_0 = arith.constant 0 : i32
    %c0_i32_1 = arith.constant 0 : i32
    return %c0_i32, %c0_i32_0 : i32, i32
  }
  func.func @transform_10(%arg0: i32) -> (i32, i32, i32) {
    %c0_i32 = arith.constant 0 : i32
    %c0_i32_0 = arith.constant 0 : i32
    %c0_i32_1 = arith.constant 0 : i32
    %c0_i32_2 = arith.constant 0 : i32
    return %c0_i32, %c0_i32_0, %c0_i32_1 : i32, i32, i32
  }
}

</mosaic_0001>

<llo_original>
// kernel: basic_block2_forward.1
$region0: #{basic_block2_forward.1}
  #allocation0 [shape = 'u32[]', space=smem, size = 0x4, offset = 0x4, fixed_abs, tag = 'smem constant byte address 0x4 - core index']
  #allocation1 [shape = 'u32[144,128]{1,0:T(1,128)}', space=vmem, size = 0x12000, scoped, tag = 'internal scratch']
  %s0 = inlined_call_operand.vmem [shape: bf16[144,512], index: 0, kind: input, shape index: {}]
  %s1 = inlined_call_operand.vmem [shape: bf16[48,144], index: 1, kind: input, shape index: {}]
  %s2 = inlined_call_operand.vmem [shape: f32[48,1], index: 2, kind: input, shape index: {}]
  %s3 = inlined_call_operand.vmem [shape: f32[512,2], index: 3, kind: input, shape index: {}]
  %s4 = inlined_call_operand.vmem [shape: f32[32,16], index: 4, kind: input, shape index: {}]
  %s5 = inlined_call_operand.vmem [shape: f32[32,1], index: 5, kind: input, shape index: {}]
  %s6 = inlined_call_operand.vmem [shape: f32[48,32], index: 6, kind: input, shape index: {}]
  %s7 = inlined_call_operand.vmem [shape: f32[48,1], index: 7, kind: input, shape index: {}]
  %s8 = inlined_call_operand.vmem [shape: f32[16,1], index: 8, kind: input, shape index: {}]
  %s9 = inlined_call_operand.vmem [shape: f32[16,1], index: 9, kind: input, shape index: {}]
  %s10 = inlined_call_operand.vmem [shape: f32[2,16,256], index: 10, kind: output, shape index: {}]
  %s11 = sld [smem:[#allocation0]]
  $region50: #{basic_block2_forward.1} parent=0
    _
  %s13 = ssub.s32 1, %s11
  %s14 = scalar_select 0, %s13, %s11
  // Predicated region
  $region2: #{basic_block2_forward.1} parent=0 // pred_check
    _
  $region3: #{basic_block2_forward.1} parent=0 // pred_check_branch
    %16 = sbr.rel (0) target = $region5
  $region4: #{basic_block2_forward.1} parent=0 // pred_region
    _
  $region5: #{basic_block2_forward.1} parent=0 // pred_fallthru
    _
  // Predicated region
  $region6: #{basic_block2_forward.1} parent=0 // pred_check
    _
  $region7: #{basic_block2_forward.1} parent=0 // pred_check_branch
    %18 = sbr.rel (0) target = $region9
  $region8: #{basic_block2_forward.1} parent=0 // pred_region
    _
  $region9: #{basic_block2_forward.1} parent=0 // pred_fallthru
    _
  // Predicated region
  $region10: #{basic_block2_forward.1} parent=0 // pred_check
    _
  $region11: #{basic_block2_forward.1} parent=0 // pred_check_branch
    %20 = sbr.rel (0) target = $region13
  $region12: #{basic_block2_forward.1} parent=0 // pred_region
    _
  $region13: #{basic_block2_forward.1} parent=0 // pred_fallthru
    _
  // Predicated region
  $region14: #{basic_block2_forward.1} parent=0 // pred_check
    _
  $region15: #{basic_block2_forward.1} parent=0 // pred_check_branch
    %22 = sbr.rel (0) target = $region17
  $region16: #{basic_block2_forward.1} parent=0 // pred_region
    _
  $region17: #{basic_block2_forward.1} parent=0 // pred_fallthru
    _
  // Predicated region
  $region18: #{basic_block2_forward.1} parent=0 // pred_check
    _
  $region19: #{basic_block2_forward.1} parent=0 // pred_check_branch
    %24 = sbr.rel (0) target = $region21
  $region20: #{basic_block2_forward.1} parent=0 // pred_region
    _
  $region21: #{basic_block2_forward.1} parent=0 // pred_fallthru
    _
  // Predicated region
  $region22: #{basic_block2_forward.1} parent=0 // pred_check
    _
  $region23: #{basic_block2_forward.1} parent=0 // pred_check_branch
    %26 = sbr.rel (0) target = $region25
  $region24: #{basic_block2_forward.1} parent=0 // pred_region
    _
  $region25: #{basic_block2_forward.1} parent=0 // pred_fallthru
    _
  // Predicated region
  $region26: #{basic_block2_forward.1} parent=0 // pred_check
    _
  $region27: #{basic_block2_forward.1} parent=0 // pred_check_branch
    %28 = sbr.rel (0) target = $region29
  $region28: #{basic_block2_forward.1} parent=0 // pred_region
    _
  $region29: #{basic_block2_forward.1} parent=0 // pred_fallthru
    _
  // Predicated region
  $region30: #{basic_block2_forward.1} parent=0 // pred_check
    _
  $region31: #{basic_block2_forward.1} parent=0 // pred_check_branch
    %30 = sbr.rel (0) target = $region33
  $region32: #{basic_block2_forward.1} parent=0 // pred_region
    _
  $region33: #{basic_block2_forward.1} parent=0 // pred_fallthru
    _
  // Predicated region
  $region34: #{basic_block2_forward.1} parent=0 // pred_check
    _
  $region35: #{basic_block2_forward.1} parent=0 // pred_check_branch
    %32 = sbr.rel (0) target = $region37
  $region36: #{basic_block2_forward.1} parent=0 // pred_region
    _
  $region37: #{basic_block2_forward.1} parent=0 // pred_fallthru
    _
  // Predicated region
  $region38: #{basic_block2_forward.1} parent=0 // pred_check
    _
  $region39: #{basic_block2_forward.1} parent=0 // pred_check_branch
    %34 = sbr.rel (0) target = $region41
  $region40: #{basic_block2_forward.1} parent=0 // pred_region
    _
  $region41: #{basic_block2_forward.1} parent=0 // pred_fallthru
    _
  %v36 = vld [vmem:[%s1] sm:$0xff]
  %v37 = vld [vmem:[%s1 + $0x8] sm:$0xff]
  %v38 = vld [vmem:[%s1 + $0x10] sm:$0xff]
  %v39 = vld [vmem:[%s1 + $0x18] sm:$0xff]
  %v40 = vld [vmem:[%s1 + $0x20] sm:$0xff]
  %v41 = vld [vmem:[%s1 + $0x28] sm:$0xff]
  %v42 = vld [vmem:[%s0] sm:$0xff]
  %v43 = vld [vmem:[%s0 + $0x8] sm:$0xff]
  %v44 = vld [vmem:[%s0 + $0x10] sm:$0xff]
  %v45 = vld [vmem:[%s0 + $0x18] sm:$0xff]
  %v46 = vld [vmem:[%s0 + $0x20] sm:$0xff]
  %v47 = vld [vmem:[%s0 + $0x28] sm:$0xff]
  %v48 = vld [vmem:[%s0 + $0x30] sm:$0xff]
  %v49 = vld [vmem:[%s0 + $0x38] sm:$0xff]
  %v50 = vld [vmem:[%s0 + $0x40] sm:$0xff]
  %v51 = vld [vmem:[%s0 + $0x48] sm:$0xff]
  %v52 = vld [vmem:[%s0 + $0x50] sm:$0xff]
  %v53 = vld [vmem:[%s0 + $0x58] sm:$0xff]
  %v54 = vld [vmem:[%s0 + $0x60] sm:$0xff]
  %v55 = vld [vmem:[%s0 + $0x68] sm:$0xff]
  %v56 = vld [vmem:[%s0 + $0x70] sm:$0xff]
  %v57 = vld [vmem:[%s0 + $0x78] sm:$0xff]
  %v58 = vld [vmem:[%s0 + $0x80] sm:$0xff]
  %v59 = vld [vmem:[%s0 + $0x88] sm:$0xff]
  %v60 = vld [vmem:[%s0 + $0x90] sm:$0xff]
  %v61 = vld [vmem:[%s0 + $0x98] sm:$0xff]
  %v62 = vld [vmem:[%s0 + $0xa0] sm:$0xff]
  %v63 = vld [vmem:[%s0 + $0xa8] sm:$0xff]
  %v64 = vld [vmem:[%s0 + $0xb0] sm:$0xff]
  %v65 = vld [vmem:[%s0 + $0xb8] sm:$0xff]
  %v66 = vld [vmem:[%s0 + $0xc0] sm:$0xff]
  %v67 = vld [vmem:[%s0 + $0xc8] sm:$0xff]
  %v68 = vld [vmem:[%s0 + $0xd0] sm:$0xff]
  %v69 = vld [vmem:[%s0 + $0xd8] sm:$0xff]
  %v70 = vld [vmem:[%s0 + $0xe0] sm:$0xff]
  %v71 = vld [vmem:[%s0 + $0xe8] sm:$0xff]
  %v72 = vld [vmem:[%s0 + $0xf0] sm:$0xff]
  %v73 = vld [vmem:[%s0 + $0xf8] sm:$0xff]
  %v74 = vld [vmem:[%s0 + $0x100] sm:$0xff]
  %v75 = vld [vmem:[%s0 + $0x108] sm:$0xff]
  %v76 = vld [vmem:[%s0 + $0x110] sm:$0xff]
  %v77 = vld [vmem:[%s0 + $0x118] sm:$0xff]
  %v78 = vld [vmem:[%s2] sm:$0xff]
  %v79 = vld [vmem:[%s2 + $0x8] sm:$0xff]
  %v80 = vld [vmem:[%s2 + $0x10] sm:$0xff]
  %v81 = vld [vmem:[%s2 + $0x18] sm:$0xff]
  %v82 = vld [vmem:[%s2 + $0x20] sm:$0xff]
  %v83 = vld [vmem:[%s2 + $0x28] sm:$0xff]
  %85 = vset.pattern.permute.xlu0 0
  %86 = vperm.xlu0 %85, %v78
  %v87 = vpop.permute.xlu0 %86
  %90 = vset.pattern.permute.xlu0 0
  %91 = vperm.xlu0 %90, %v79
  %v92 = vpop.permute.xlu0 %91
  %95 = vset.pattern.permute.xlu0 0
  %96 = vperm.xlu0 %95, %v80
  %v97 = vpop.permute.xlu0 %96
  %100 = vset.pattern.permute.xlu0 0
  %101 = vperm.xlu0 %100, %v81
  %v102 = vpop.permute.xlu0 %101
  %105 = vset.pattern.permute.xlu0 0
  %106 = vperm.xlu0 %105, %v82
  %v107 = vpop.permute.xlu0 %106
  %110 = vset.pattern.permute.xlu0 0
  %111 = vperm.xlu0 %110, %v83
  %v112 = vpop.permute.xlu0 %111
  %v120 = vunpack.c.l.b16 %v36
  %v121 = vunpack.c.h.b16 %v36
  %v122 = vunpack.c.l.b16 %v37
  %v123 = vunpack.c.h.b16 %v37
  %v124 = vunpack.c.l.b16 %v38
  %v125 = vunpack.c.h.b16 %v38
  %v126 = vunpack.c.l.b16 %v39
  %v127 = vunpack.c.h.b16 %v39
  %v128 = vunpack.c.l.b16 %v40
  %v129 = vunpack.c.h.b16 %v40
  %v130 = vunpack.c.l.b16 %v41
  %v131 = vunpack.c.h.b16 %v41
  %v132 = vpack.c.b16 %v122, %v120
  %v133 = vpack.c.b16 %v123, %v121
  %v134 = vpack.c.b16 %v126, %v124
  %v135 = vpack.c.b16 %v127, %v125
  %v136 = vpack.c.b16 %v130, %v128
  %v137 = vpack.c.b16 %v131, %v129
  %v177 = vunpack.c.l.b16 %v42
  %v178 = vunpack.c.h.b16 %v42
  %v179 = vunpack.c.l.b16 %v43
  %v180 = vunpack.c.h.b16 %v43
  %v181 = vunpack.c.l.b16 %v44
  %v182 = vunpack.c.h.b16 %v44
  %v183 = vunpack.c.l.b16 %v45
  %v184 = vunpack.c.h.b16 %v45
  %v185 = vunpack.c.l.b16 %v46
  %v186 = vunpack.c.h.b16 %v46
  %v187 = vunpack.c.l.b16 %v47
  %v188 = vunpack.c.h.b16 %v47
  %v189 = vunpack.c.l.b16 %v48
  %v190 = vunpack.c.h.b16 %v48
  %v191 = vunpack.c.l.b16 %v49
  %v192 = vunpack.c.h.b16 %v49
  %v193 = vunpack.c.l.b16 %v50
  %v194 = vunpack.c.h.b16 %v50
  %v195 = vunpack.c.l.b16 %v51
  %v196 = vunpack.c.h.b16 %v51
  %v197 = vunpack.c.l.b16 %v52
  %v198 = vunpack.c.h.b16 %v52
  %v199 = vunpack.c.l.b16 %v53
  %v200 = vunpack.c.h.b16 %v53
  %v201 = vunpack.c.l.b16 %v54
  %v202 = vunpack.c.h.b16 %v54
  %v203 = vunpack.c.l.b16 %v55
  %v204 = vunpack.c.h.b16 %v55
  %v205 = vunpack.c.l.b16 %v56
  %v206 = vunpack.c.h.b16 %v56
  %v207 = vunpack.c.l.b16 %v57
  %v208 = vunpack.c.h.b16 %v57
  %v209 = vunpack.c.l.b16 %v58
  %v210 = vunpack.c.h.b16 %v58
  %v211 = vunpack.c.l.b16 %v59
  %v212 = vunpack.c.h.b16 %v59
  %v213 = vunpack.c.l.b16 %v60
  %v214 = vunpack.c.h.b16 %v60
  %v215 = vunpack.c.l.b16 %v61
  %v216 = vunpack.c.h.b16 %v61
  %v217 = vunpack.c.l.b16 %v62
  %v218 = vunpack.c.h.b16 %v62
  %v219 = vunpack.c.l.b16 %v63
  %v220 = vunpack.c.h.b16 %v63
  %v221 = vunpack.c.l.b16 %v64
  %v222 = vunpack.c.h.b16 %v64
  %v223 = vunpack.c.l.b16 %v65
  %v224 = vunpack.c.h.b16 %v65
  %v225 = vunpack.c.l.b16 %v66
  %v226 = vunpack.c.h.b16 %v66
  %v227 = vunpack.c.l.b16 %v67
  %v228 = vunpack.c.h.b16 %v67
  %v229 = vunpack.c.l.b16 %v68
  %v230 = vunpack.c.h.b16 %v68
  %v231 = vunpack.c.l.b16 %v69
  %v232 = vunpack.c.h.b16 %v69
  %v233 = vunpack.c.l.b16 %v70
  %v234 = vunpack.c.h.b16 %v70
  %v235 = vunpack.c.l.b16 %v71
  %v236 = vunpack.c.h.b16 %v71
  %v237 = vunpack.c.l.b16 %v72
  %v238 = vunpack.c.h.b16 %v72
  %v239 = vunpack.c.l.b16 %v73
  %v240 = vunpack.c.h.b16 %v73
  %v241 = vunpack.c.l.b16 %v74
  %v242 = vunpack.c.h.b16 %v74
  %v243 = vunpack.c.l.b16 %v75
  %v244 = vunpack.c.h.b16 %v75
  %v245 = vunpack.c.l.b16 %v76
  %v246 = vunpack.c.h.b16 %v76
  %v247 = vunpack.c.l.b16 %v77
  %v248 = vunpack.c.h.b16 %v77
  %v249 = vpack.c.b16 %v181, %v177
  %v250 = vpack.c.b16 %v182, %v178
  %v251 = vpack.c.b16 %v183, %v179
  %v252 = vpack.c.b16 %v184, %v180
  %v253 = vpack.c.b16 %v189, %v185
  %v254 = vpack.c.b16 %v190, %v186
  %v255 = vpack.c.b16 %v191, %v187
  %v256 = vpack.c.b16 %v192, %v188
  %v257 = vpack.c.b16 %v197, %v193
  %v258 = vpack.c.b16 %v198, %v194
  %v259 = vpack.c.b16 %v199, %v195
  %v260 = vpack.c.b16 %v200, %v196
  %v261 = vpack.c.b16 %v205, %v201
  %v262 = vpack.c.b16 %v206, %v202
  %v263 = vpack.c.b16 %v207, %v203
  %v264 = vpack.c.b16 %v208, %v204
  %v265 = vpack.c.b16 %v213, %v209
  %v266 = vpack.c.b16 %v214, %v210
  %v267 = vpack.c.b16 %v215, %v211
  %v268 = vpack.c.b16 %v216, %v212
  %v269 = vpack.c.b16 %v221, %v217
  %v270 = vpack.c.b16 %v222, %v218
  %v271 = vpack.c.b16 %v223, %v219
  %v272 = vpack.c.b16 %v224, %v220
  %v273 = vpack.c.b16 %v229, %v225
  %v274 = vpack.c.b16 %v230, %v226
  %v275 = vpack.c.b16 %v231, %v227
  %v276 = vpack.c.b16 %v232, %v228
  %v277 = vpack.c.b16 %v237, %v233
  %v278 = vpack.c.b16 %v238, %v234
  %v279 = vpack.c.b16 %v239, %v235
  %v280 = vpack.c.b16 %v240, %v236
  %v281 = vpack.c.b16 %v245, %v241
  %v282 = vpack.c.b16 %v246, %v242
  %v283 = vpack.c.b16 %v247, %v243
  %v284 = vpack.c.b16 %v248, %v244
  %vm321 = vcmask 130048
  %v323 = vsel %vm321, %v133, 0
  %v326 = vsel %vm321, %v135, 0
  %v329 = vsel %vm321, %v137, 0
  %331 = vmatprep.subr.bf16.mxu0 %v278
  %332 = vmatpush1.bf16.msra.mxu0 %v277
  %333 = vmatprep.subr.bf16.mxu0 %v274
  %334 = vmatpush1.bf16.msra.mxu0 %v273
  %335 = vmatprep.subr.bf16.mxu0 %v270
  %336 = vmatpush1.bf16.msra.mxu0 %v269
  %337 = vmatprep.subr.bf16.mxu0 %v266
  %338 = vmatpush1.bf16.msra.mxu0 %v265
  %339 = vmatprep.subr.bf16.mxu0 %v262
  %340 = vmatpush1.bf16.msra.mxu0 %v261
  %341 = vmatprep.subr.bf16.mxu0 %v258
  %342 = vmatpush1.bf16.msra.mxu0 %v257
  %343 = vmatprep.subr.bf16.mxu0 %v254
  %344 = vmatpush1.bf16.msra.mxu0 %v253
  %345 = vmatprep.subr.bf16.mxu0 %v250
  %346 = vmatpush1.bf16.msra.mxu0 %v249
  %347 = vmatprep.subr.bf16.mxu0 0
  %348 = vmatpush2.bf16.msra.mxu0 0
  %349 = vmatprep.subr.bf16.mxu0 0
  %350 = vmatpush2.bf16.msra.mxu0 0
  %351 = vmatprep.subr.bf16.mxu0 0
  %352 = vmatpush2.bf16.msra.mxu0 0
  %353 = vmatprep.subr.bf16.mxu0 0
  %354 = vmatpush2.bf16.msra.mxu0 0
  %355 = vmatprep.subr.bf16.mxu0 0
  %356 = vmatpush2.bf16.msra.mxu0 0
  %357 = vmatprep.subr.bf16.mxu0 0
  %358 = vmatpush2.bf16.msra.mxu0 0
  %359 = vmatprep.subr.bf16.mxu0 0
  %360 = vmatpush2.bf16.msra.mxu0 0
  %361 = vmatprep.subr.bf16.mxu0 %v282
  %362 = vmatpush2.bf16.msra.mxu0 %v281
  %363 = vmatprep.mubr.bf16.mxu0 %v323
  %364 = vmatmul.mubr.bf16.gmra.mxu0 %v132
  %v365 = vpop.f32.mrf.mxu0
  %v366 = vadd.f32 %v87, %v365
  %v367 = vpop.f32.mrf.mxu0
  %v368 = vadd.f32 %v87, %v367
  %v369 = vpop.f32.mrf.mxu0
  %v370 = vadd.f32 %v92, %v369
  %v371 = vpop.f32.mrf.mxu0
  %v372 = vadd.f32 %v92, %v371
  %373 = vmatprep.mubr.bf16.mxu0 %v326
  %374 = vmatmul.mubr.bf16.gmra.mxu0 %v134
  %v375 = vpop.f32.mrf.mxu0
  %v376 = vadd.f32 %v97, %v375
  %v377 = vpop.f32.mrf.mxu0
  %v378 = vadd.f32 %v97, %v377
  %v379 = vpop.f32.mrf.mxu0
  %v380 = vadd.f32 %v102, %v379
  %v381 = vpop.f32.mrf.mxu0
  %v382 = vadd.f32 %v102, %v381
  %383 = vmatprep.mubr.bf16.mxu0 %v329
  %384 = vmatmul.mubr.bf16.gmra.mxu0 %v136
  %v385 = vpop.f32.mrf.mxu0
  %v386 = vadd.f32 %v107, %v385
  %v387 = vpop.f32.mrf.mxu0
  %v388 = vadd.f32 %v107, %v387
  %v389 = vpop.f32.mrf.mxu0
  %v390 = vadd.f32 %v112, %v389
  %v391 = vpop.f32.mrf.mxu0
  %v392 = vadd.f32 %v112, %v391
  %393 = vdwg.mxu0
  %394 = vmatprep.subr.bf16.mxu0 %v280
  %395 = vmatpush1.bf16.msra.mxu0 %v279
  %396 = vmatprep.subr.bf16.mxu0 %v276
  %397 = vmatpush1.bf16.msra.mxu0 %v275
  %398 = vmatprep.subr.bf16.mxu0 %v272
  %399 = vmatpush1.bf16.msra.mxu0 %v271
  %400 = vmatprep.subr.bf16.mxu0 %v268
  %401 = vmatpush1.bf16.msra.mxu0 %v267
  %402 = vmatprep.subr.bf16.mxu0 %v264
  %403 = vmatpush1.bf16.msra.mxu0 %v263
  %404 = vmatprep.subr.bf16.mxu0 %v260
  %405 = vmatpush1.bf16.msra.mxu0 %v259
  %406 = vmatprep.subr.bf16.mxu0 %v256
  %407 = vmatpush1.bf16.msra.mxu0 %v255
  %408 = vmatprep.subr.bf16.mxu0 %v252
  %409 = vmatpush1.bf16.msra.mxu0 %v251
  %410 = vmatprep.subr.bf16.mxu0 0
  %411 = vmatpush2.bf16.msra.mxu0 0
  %412 = vmatprep.subr.bf16.mxu0 0
  %413 = vmatpush2.bf16.msra.mxu0 0
  %414 = vmatprep.subr.bf16.mxu0 0
  %415 = vmatpush2.bf16.msra.mxu0 0
  %416 = vmatprep.subr.bf16.mxu0 0
  %417 = vmatpush2.bf16.msra.mxu0 0
  %418 = vmatprep.subr.bf16.mxu0 0
  %419 = vmatpush2.bf16.msra.mxu0 0
  %420 = vmatprep.subr.bf16.mxu0 0
  %421 = vmatpush2.bf16.msra.mxu0 0
  %422 = vmatprep.subr.bf16.mxu0 0
  %423 = vmatpush2.bf16.msra.mxu0 0
  %424 = vmatprep.subr.bf16.mxu0 %v284
  %425 = vmatpush2.bf16.msra.mxu0 %v283
  %426 = vmatprep.mubr.bf16.mxu0 %v323
  %427 = vmatmul.mubr.bf16.gmra.mxu0 %v132
  %v428 = vpop.f32.mrf.mxu0
  %v429 = vadd.f32 %v87, %v428
  %v430 = vpop.f32.mrf.mxu0
  %v431 = vadd.f32 %v87, %v430
  %v432 = vpop.f32.mrf.mxu0
  %v433 = vadd.f32 %v92, %v432
  %v434 = vpop.f32.mrf.mxu0
  %v435 = vadd.f32 %v92, %v434
  %436 = vmatprep.mubr.bf16.mxu0 %v326
  %437 = vmatmul.mubr.bf16.gmra.mxu0 %v134
  %v438 = vpop.f32.mrf.mxu0
  %v439 = vadd.f32 %v97, %v438
  %v440 = vpop.f32.mrf.mxu0
  %v441 = vadd.f32 %v97, %v440
  %v442 = vpop.f32.mrf.mxu0
  %v443 = vadd.f32 %v102, %v442
  %v444 = vpop.f32.mrf.mxu0
  %v445 = vadd.f32 %v102, %v444
  %446 = vmatprep.mubr.bf16.mxu0 %v329
  %447 = vmatmul.mubr.bf16.gmra.mxu0 %v136
  %v448 = vpop.f32.mrf.mxu0
  %v449 = vadd.f32 %v107, %v448
  %v450 = vpop.f32.mrf.mxu0
  %v451 = vadd.f32 %v107, %v450
  %v452 = vpop.f32.mrf.mxu0
  %v453 = vadd.f32 %v112, %v452
  %v454 = vpop.f32.mrf.mxu0
  %v455 = vadd.f32 %v112, %v454
  %456 = vdwg.mxu0
  %v457 = vmax.f32 %v366, 0.0
  %v458 = vmax.f32 %v368, 0.0
  %v459 = vmax.f32 %v429, 0.0
  %v460 = vmax.f32 %v431, 0.0
  %v461 = vmax.f32 %v370, 0.0
  %v462 = vmax.f32 %v372, 0.0
  %v463 = vmax.f32 %v433, 0.0
  %v464 = vmax.f32 %v435, 0.0
  %v465 = vmax.f32 %v376, 0.0
  %v466 = vmax.f32 %v378, 0.0
  %v467 = vmax.f32 %v439, 0.0
  %v468 = vmax.f32 %v441, 0.0
  %v469 = vmax.f32 %v380, 0.0
  %v470 = vmax.f32 %v382, 0.0
  %v471 = vmax.f32 %v443, 0.0
  %v472 = vmax.f32 %v445, 0.0
  %v473 = vmax.f32 %v386, 0.0
  %v474 = vmax.f32 %v388, 0.0
  %v475 = vmax.f32 %v449, 0.0
  %v476 = vmax.f32 %v451, 0.0
  %v477 = vmax.f32 %v390, 0.0
  %v478 = vmax.f32 %v392, 0.0
  %v479 = vmax.f32 %v453, 0.0
  %v480 = vmax.f32 %v455, 0.0
  %v481 = vld [vmem:[%s3] sm:$0xff]
  %v482 = vld [vmem:[%s3 + $0x8] sm:$0xff]
  %v483 = vld [vmem:[%s3 + $0x10] sm:$0xff]
  %v484 = vld [vmem:[%s3 + $0x18] sm:$0xff]
  %v485 = vld [vmem:[%s3 + $0x20] sm:$0xff]
  %v486 = vld [vmem:[%s3 + $0x28] sm:$0xff]
  %v487 = vld [vmem:[%s3 + $0x30] sm:$0xff]
  %v488 = vld [vmem:[%s3 + $0x38] sm:$0xff]
  %v489 = vld [vmem:[%s3 + $0x40] sm:$0xff]
  %v490 = vld [vmem:[%s3 + $0x48] sm:$0xff]
  %v491 = vld [vmem:[%s3 + $0x50] sm:$0xff]
  %v492 = vld [vmem:[%s3 + $0x58] sm:$0xff]
  %v493 = vld [vmem:[%s3 + $0x60] sm:$0xff]
  %v494 = vld [vmem:[%s3 + $0x68] sm:$0xff]
  %v495 = vld [vmem:[%s3 + $0x70] sm:$0xff]
  %v496 = vld [vmem:[%s3 + $0x78] sm:$0xff]
  %v497 = vld [vmem:[%s3 + $0x80] sm:$0xff]
  %v498 = vld [vmem:[%s3 + $0x88] sm:$0xff]
  %v499 = vld [vmem:[%s3 + $0x90] sm:$0xff]
  %v500 = vld [vmem:[%s3 + $0x98] sm:$0xff]
  %v501 = vld [vmem:[%s3 + $0xa0] sm:$0xff]
  %v502 = vld [vmem:[%s3 + $0xa8] sm:$0xff]
  %v503 = vld [vmem:[%s3 + $0xb0] sm:$0xff]
  %v504 = vld [vmem:[%s3 + $0xb8] sm:$0xff]
  %v505 = vld [vmem:[%s3 + $0xc0] sm:$0xff]
  %v506 = vld [vmem:[%s3 + $0xc8] sm:$0xff]
  %v507 = vld [vmem:[%s3 + $0xd0] sm:$0xff]
  %v508 = vld [vmem:[%s3 + $0xd8] sm:$0xff]
  %v509 = vld [vmem:[%s3 + $0xe0] sm:$0xff]
  %v510 = vld [vmem:[%s3 + $0xe8] sm:$0xff]
  %v511 = vld [vmem:[%s3 + $0xf0] sm:$0xff]
  %v512 = vld [vmem:[%s3 + $0xf8] sm:$0xff]
  %v513 = vld [vmem:[%s3 + $0x100] sm:$0xff]
  %v514 = vld [vmem:[%s3 + $0x108] sm:$0xff]
  %v515 = vld [vmem:[%s3 + $0x110] sm:$0xff]
  %v516 = vld [vmem:[%s3 + $0x118] sm:$0xff]
  %v517 = vld [vmem:[%s3 + $0x120] sm:$0xff]
  %v518 = vld [vmem:[%s3 + $0x128] sm:$0xff]
  %v519 = vld [vmem:[%s3 + $0x130] sm:$0xff]
  %v520 = vld [vmem:[%s3 + $0x138] sm:$0xff]
  %v521 = vld [vmem:[%s3 + $0x140] sm:$0xff]
  %v522 = vld [vmem:[%s3 + $0x148] sm:$0xff]
  %v523 = vld [vmem:[%s3 + $0x150] sm:$0xff]
  %v524 = vld [vmem:[%s3 + $0x158] sm:$0xff]
  %v525 = vld [vmem:[%s3 + $0x160] sm:$0xff]
  %v526 = vld [vmem:[%s3 + $0x168] sm:$0xff]
  %v527 = vld [vmem:[%s3 + $0x170] sm:$0xff]
  %v528 = vld [vmem:[%s3 + $0x178] sm:$0xff]
  %v529 = vld [vmem:[%s3 + $0x180] sm:$0xff]
  %v530 = vld [vmem:[%s3 + $0x188] sm:$0xff]
  %v531 = vld [vmem:[%s3 + $0x190] sm:$0xff]
  %v532 = vld [vmem:[%s3 + $0x198] sm:$0xff]
  %v533 = vld [vmem:[%s3 + $0x1a0] sm:$0xff]
  %v534 = vld [vmem:[%s3 + $0x1a8] sm:$0xff]
  %v535 = vld [vmem:[%s3 + $0x1b0] sm:$0xff]
  %v536 = vld [vmem:[%s3 + $0x1b8] sm:$0xff]
  %v537 = vld [vmem:[%s3 + $0x1c0] sm:$0xff]
  %v538 = vld [vmem:[%s3 + $0x1c8] sm:$0xff]
  %v539 = vld [vmem:[%s3 + $0x1d0] sm:$0xff]
  %v540 = vld [vmem:[%s3 + $0x1d8] sm:$0xff]
  %v541 = vld [vmem:[%s3 + $0x1e0] sm:$0xff]
  %v542 = vld [vmem:[%s3 + $0x1e8] sm:$0xff]
  %v543 = vld [vmem:[%s3 + $0x1f0] sm:$0xff]
  %v544 = vld [vmem:[%s3 + $0x1f8] sm:$0xff]
  %545 = vmatprep.subr.mxu0 0.0
  %546 = vmatpush1.msra.mxu0 %v496
  %547 = vmatprep.subr.mxu0 0.0
  %548 = vmatpush1.msra.mxu0 %v495
  %549 = vmatprep.subr.mxu0 0.0
  %550 = vmatpush1.msra.mxu0 %v494
  %551 = vmatprep.subr.mxu0 0.0
  %552 = vmatpush1.msra.mxu0 %v493
  %553 = vmatprep.subr.mxu0 0.0
  %554 = vmatpush1.msra.mxu0 %v492
  %555 = vmatprep.subr.mxu0 0.0
  %556 = vmatpush1.msra.mxu0 %v491
  %557 = vmatprep.subr.mxu0 0.0
  %558 = vmatpush1.msra.mxu0 %v490
  %559 = vmatprep.subr.mxu0 0.0
  %560 = vmatpush1.msra.mxu0 %v489
  %561 = vmatprep.subr.mxu0 0.0
  %562 = vmatpush1.msra.mxu0 %v488
  %563 = vmatprep.subr.mxu0 0.0
  %564 = vmatpush1.msra.mxu0 %v487
  %565 = vmatprep.subr.mxu0 0.0
  %566 = vmatpush1.msra.mxu0 %v486
  %567 = vmatprep.subr.mxu0 0.0
  %568 = vmatpush1.msra.mxu0 %v485
  %569 = vmatprep.subr.mxu0 0.0
  %570 = vmatpush1.msra.mxu0 %v484
  %571 = vmatprep.subr.mxu0 0.0
  %572 = vmatpush1.msra.mxu0 %v483
  %573 = vmatprep.subr.mxu0 0.0
  %574 = vmatpush1.msra.mxu0 %v482
  %575 = vmatprep.subr.mxu0 0.0
  %576 = vmatpush1.msra.mxu0 %v481
  %577 = vmatprep.subr.mxu0 0.0
  %578 = vmatpush2.msra.mxu0 %v512
  %579 = vmatprep.subr.mxu0 0.0
  %580 = vmatpush2.msra.mxu0 %v511
  %581 = vmatprep.subr.mxu0 0.0
  %582 = vmatpush2.msra.mxu0 %v510
  %583 = vmatprep.subr.mxu0 0.0
  %584 = vmatpush2.msra.mxu0 %v509
  %585 = vmatprep.subr.mxu0 0.0
  %586 = vmatpush2.msra.mxu0 %v508
  %587 = vmatprep.subr.mxu0 0.0
  %588 = vmatpush2.msra.mxu0 %v507
  %589 = vmatprep.subr.mxu0 0.0
  %590 = vmatpush2.msra.mxu0 %v506
  %591 = vmatprep.subr.mxu0 0.0
  %592 = vmatpush2.msra.mxu0 %v505
  %593 = vmatprep.subr.mxu0 0.0
  %594 = vmatpush2.msra.mxu0 %v504
  %595 = vmatprep.subr.mxu0 0.0
  %596 = vmatpush2.msra.mxu0 %v503
  %597 = vmatprep.subr.mxu0 0.0
  %598 = vmatpush2.msra.mxu0 %v502
  %599 = vmatprep.subr.mxu0 0.0
  %600 = vmatpush2.msra.mxu0 %v501
  %601 = vmatprep.subr.mxu0 0.0
  %602 = vmatpush2.msra.mxu0 %v500
  %603 = vmatprep.subr.mxu0 0.0
  %604 = vmatpush2.msra.mxu0 %v499
  %605 = vmatprep.subr.mxu0 0.0
  %606 = vmatpush2.msra.mxu0 %v498
  %607 = vmatprep.subr.mxu0 0.0
  %608 = vmatpush2.msra.mxu0 %v497
  %609 = vmatprep.mubr.f32.mxu0 %v458
  %610 = vmatmul.mubr.f32.gmra.mxu0 %v457
  %v611 = vpop.f32.mrf.mxu0
  %v612 = vadd.f32 0.0, %v611
  %v613 = vpop.f32.mrf.mxu0
  %614 = vmatprep.mubr.f32.mxu0 %v462
  %615 = vmatmul.mubr.f32.gmra.mxu0 %v461
  %v616 = vpop.f32.mrf.mxu0
  %v617 = vadd.f32 0.0, %v616
  %v618 = vpop.f32.mrf.mxu0
  %619 = vmatprep.mubr.f32.mxu0 %v466
  %620 = vmatmul.mubr.f32.gmra.mxu0 %v465
  %v621 = vpop.f32.mrf.mxu0
  %v622 = vadd.f32 0.0, %v621
  %v623 = vpop.f32.mrf.mxu0
  %624 = vmatprep.mubr.f32.mxu0 %v470
  %625 = vmatmul.mubr.f32.gmra.mxu0 %v469
  %v626 = vpop.f32.mrf.mxu0
  %v627 = vadd.f32 0.0, %v626
  %v628 = vpop.f32.mrf.mxu0
  %629 = vmatprep.mubr.f32.mxu0 %v474
  %630 = vmatmul.mubr.f32.gmra.mxu0 %v473
  %v631 = vpop.f32.mrf.mxu0
  %v632 = vadd.f32 0.0, %v631
  %v633 = vpop.f32.mrf.mxu0
  %634 = vmatprep.mubr.f32.mxu0 %v478
  %635 = vmatmul.mubr.f32.gmra.mxu0 %v477
  %v636 = vpop.f32.mrf.mxu0
  %v637 = vadd.f32 0.0, %v636
  %v638 = vpop.f32.mrf.mxu0
  %639 = vdwg.mxu0
  %640 = vmatprep.subr.mxu0 0.0
  %641 = vmatpush1.msra.mxu0 %v528
  %642 = vmatprep.subr.mxu0 0.0
  %643 = vmatpush1.msra.mxu0 %v527
  %644 = vmatprep.subr.mxu0 0.0
  %645 = vmatpush1.msra.mxu0 %v526
  %646 = vmatprep.subr.mxu0 0.0
  %647 = vmatpush1.msra.mxu0 %v525
  %648 = vmatprep.subr.mxu0 0.0
  %649 = vmatpush1.msra.mxu0 %v524
  %650 = vmatprep.subr.mxu0 0.0
  %651 = vmatpush1.msra.mxu0 %v523
  %652 = vmatprep.subr.mxu0 0.0
  %653 = vmatpush1.msra.mxu0 %v522
  %654 = vmatprep.subr.mxu0 0.0
  %655 = vmatpush1.msra.mxu0 %v521
  %656 = vmatprep.subr.mxu0 0.0
  %657 = vmatpush1.msra.mxu0 %v520
  %658 = vmatprep.subr.mxu0 0.0
  %659 = vmatpush1.msra.mxu0 %v519
  %660 = vmatprep.subr.mxu0 0.0
  %661 = vmatpush1.msra.mxu0 %v518
  %662 = vmatprep.subr.mxu0 0.0
  %663 = vmatpush1.msra.mxu0 %v517
  %664 = vmatprep.subr.mxu0 0.0
  %665 = vmatpush1.msra.mxu0 %v516
  %666 = vmatprep.subr.mxu0 0.0
  %667 = vmatpush1.msra.mxu0 %v515
  %668 = vmatprep.subr.mxu0 0.0
  %669 = vmatpush1.msra.mxu0 %v514
  %670 = vmatprep.subr.mxu0 0.0
  %671 = vmatpush1.msra.mxu0 %v513
  %672 = vmatprep.subr.mxu0 0.0
  %673 = vmatpush2.msra.mxu0 %v544
  %674 = vmatprep.subr.mxu0 0.0
  %675 = vmatpush2.msra.mxu0 %v543
  %676 = vmatprep.subr.mxu0 0.0
  %677 = vmatpush2.msra.mxu0 %v542
  %678 = vmatprep.subr.mxu0 0.0
  %679 = vmatpush2.msra.mxu0 %v541
  %680 = vmatprep.subr.mxu0 0.0
  %681 = vmatpush2.msra.mxu0 %v540
  %682 = vmatprep.subr.mxu0 0.0
  %683 = vmatpush2.msra.mxu0 %v539
  %684 = vmatprep.subr.mxu0 0.0
  %685 = vmatpush2.msra.mxu0 %v538
  %686 = vmatprep.subr.mxu0 0.0
  %687 = vmatpush2.msra.mxu0 %v537
  %688 = vmatprep.subr.mxu0 0.0
  %689 = vmatpush2.msra.mxu0 %v536
  %690 = vmatprep.subr.mxu0 0.0
  %691 = vmatpush2.msra.mxu0 %v535
  %692 = vmatprep.subr.mxu0 0.0
  %693 = vmatpush2.msra.mxu0 %v534
  %694 = vmatprep.subr.mxu0 0.0
  %695 = vmatpush2.msra.mxu0 %v533
  %696 = vmatprep.subr.mxu0 0.0
  %697 = vmatpush2.msra.mxu0 %v532
  %698 = vmatprep.subr.mxu0 0.0
  %699 = vmatpush2.msra.mxu0 %v531
  %700 = vmatprep.subr.mxu0 0.0
  %701 = vmatpush2.msra.mxu0 %v530
  %702 = vmatprep.subr.mxu0 0.0
  %703 = vmatpush2.msra.mxu0 %v529
  %704 = vmatprep.mubr.f32.mxu0 %v460
  %705 = vmatmul.mubr.f32.gmra.mxu0 %v459
  %v706 = vpop.f32.mrf.mxu0
  %v707 = vadd.f32 %v612, %v706
  %v708 = vpop.f32.mrf.mxu0
  %709 = vmatprep.mubr.f32.mxu0 %v464
  %710 = vmatmul.mubr.f32.gmra.mxu0 %v463
  %v711 = vpop.f32.mrf.mxu0
  %v712 = vadd.f32 %v617, %v711
  %v713 = vpop.f32.mrf.mxu0
  %714 = vmatprep.mubr.f32.mxu0 %v468
  %715 = vmatmul.mubr.f32.gmra.mxu0 %v467
  %v716 = vpop.f32.mrf.mxu0
  %v717 = vadd.f32 %v622, %v716
  %v718 = vpop.f32.mrf.mxu0
  %719 = vmatprep.mubr.f32.mxu0 %v472
  %720 = vmatmul.mubr.f32.gmra.mxu0 %v471
  %v721 = vpop.f32.mrf.mxu0
  %v722 = vadd.f32 %v627, %v721
  %v723 = vpop.f32.mrf.mxu0
  %724 = vmatprep.mubr.f32.mxu0 %v476
  %725 = vmatmul.mubr.f32.gmra.mxu0 %v475
  %v726 = vpop.f32.mrf.mxu0
  %v727 = vadd.f32 %v632, %v726
  %v728 = vpop.f32.mrf.mxu0
  %729 = vmatprep.mubr.f32.mxu0 %v480
  %730 = vmatmul.mubr.f32.gmra.mxu0 %v479
  %v731 = vpop.f32.mrf.mxu0
  %v732 = vadd.f32 %v637, %v731
  %v733 = vpop.f32.mrf.mxu0
  %734 = vdwg.mxu0
  %v735 = vadd.f32 %v707, %v717
  %v736 = vadd.f32 %v712, %v722
  %v737 = vadd.f32 %v735, %v727
  %v738 = vadd.f32 %v736, %v732
  %v739 = vld [vmem:[%s4] sm:$0xff]
  %v740 = vld [vmem:[%s4 + $0x8] sm:$0xff]
  %v741 = vld [vmem:[%s4 + $0x10] sm:$0xff]
  %v742 = vld [vmem:[%s4 + $0x18] sm:$0xff]
  %v743 = vld [vmem:[%s5] sm:$0xff]
  %v744 = vld [vmem:[%s5 + $0x8] sm:$0xff]
  %v745 = vld [vmem:[%s5 + $0x10] sm:$0xff]
  %v746 = vld [vmem:[%s5 + $0x18] sm:$0xff]
  %748 = vset.pattern.permute.xlu0 0
  %749 = vperm.xlu0 %748, %v743
  %v750 = vpop.permute.xlu0 %749
  %753 = vset.pattern.permute.xlu0 0
  %754 = vperm.xlu0 %753, %v744
  %v755 = vpop.permute.xlu0 %754
  %758 = vset.pattern.permute.xlu0 0
  %759 = vperm.xlu0 %758, %v745
  %v760 = vpop.permute.xlu0 %759
  %763 = vset.pattern.permute.xlu0 0
  %764 = vperm.xlu0 %763, %v746
  %v765 = vpop.permute.xlu0 %764
  %v768 = vsel %vm321, %v739, 0
  %v771 = vsel %vm321, %v740, 0
  %v774 = vsel %vm321, %v741, 0
  %v777 = vsel %vm321, %v742, 0
  %779 = vmatprep.subr.mxu0 0.0
  %780 = vmatpush1.msra.mxu0 0.0
  %781 = vmatprep.subr.mxu0 0.0
  %782 = vmatpush1.msra.mxu0 0.0
  %783 = vmatprep.subr.mxu0 0.0
  %784 = vmatpush1.msra.mxu0 0.0
  %785 = vmatprep.subr.mxu0 0.0
  %786 = vmatpush1.msra.mxu0 0.0
  %787 = vmatprep.subr.mxu0 0.0
  %788 = vmatpush1.msra.mxu0 0.0
  %789 = vmatprep.subr.mxu0 0.0
  %790 = vmatpush1.msra.mxu0 0.0
  %791 = vmatprep.subr.mxu0 0.0
  %792 = vmatpush1.msra.mxu0 0.0
  %793 = vmatprep.subr.mxu0 0.0
  %794 = vmatpush1.msra.mxu0 0.0
  %795 = vmatprep.subr.mxu0 0.0
  %796 = vmatpush1.msra.mxu0 0.0
  %797 = vmatprep.subr.mxu0 0.0
  %798 = vmatpush1.msra.mxu0 0.0
  %799 = vmatprep.subr.mxu0 0.0
  %800 = vmatpush1.msra.mxu0 0.0
  %801 = vmatprep.subr.mxu0 0.0
  %802 = vmatpush1.msra.mxu0 0.0
  %803 = vmatprep.subr.mxu0 0.0
  %804 = vmatpush1.msra.mxu0 0.0
  %805 = vmatprep.subr.mxu0 0.0
  %806 = vmatpush1.msra.mxu0 0.0
  %807 = vmatprep.subr.mxu0 0.0
  %808 = vmatpush1.msra.mxu0 %v738
  %809 = vmatprep.subr.mxu0 0.0
  %810 = vmatpush1.msra.mxu0 %v737
  %811 = vmatprep.subr.mxu0 0.0
  %812 = vmatpush2.msra.mxu0 0.0
  %813 = vmatprep.subr.mxu0 0.0
  %814 = vmatpush2.msra.mxu0 0.0
  %815 = vmatprep.subr.mxu0 0.0
  %816 = vmatpush2.msra.mxu0 0.0
  %817 = vmatprep.subr.mxu0 0.0
  %818 = vmatpush2.msra.mxu0 0.0
  %819 = vmatprep.subr.mxu0 0.0
  %820 = vmatpush2.msra.mxu0 0.0
  %821 = vmatprep.subr.mxu0 0.0
  %822 = vmatpush2.msra.mxu0 0.0
  %823 = vmatprep.subr.mxu0 0.0
  %824 = vmatpush2.msra.mxu0 0.0
  %825 = vmatprep.subr.mxu0 0.0
  %826 = vmatpush2.msra.mxu0 0.0
  %827 = vmatprep.subr.mxu0 0.0
  %828 = vmatpush2.msra.mxu0 0.0
  %829 = vmatprep.subr.mxu0 0.0
  %830 = vmatpush2.msra.mxu0 0.0
  %831 = vmatprep.subr.mxu0 0.0
  %832 = vmatpush2.msra.mxu0 0.0
  %833 = vmatprep.subr.mxu0 0.0
  %834 = vmatpush2.msra.mxu0 0.0
  %835 = vmatprep.subr.mxu0 0.0
  %836 = vmatpush2.msra.mxu0 0.0
  %837 = vmatprep.subr.mxu0 0.0
  %838 = vmatpush2.msra.mxu0 0.0
  %839 = vmatprep.subr.mxu0 0.0
  %840 = vmatpush2.msra.mxu0 0.0
  %841 = vmatprep.subr.mxu0 0.0
  %842 = vmatpush2.msra.mxu0 0.0
  %843 = vmatprep.mubr.f32.mxu0 0.0
  %844 = vmatmul.mubr.f32.gmra.mxu0 %v768
  %v845 = vpop.f32.mrf.mxu0
  %v846 = vadd.f32 %v750, %v845
  %v847 = vpop.f32.mrf.mxu0
  %848 = vmatprep.mubr.f32.mxu0 0.0
  %849 = vmatmul.mubr.f32.gmra.mxu0 %v771
  %v850 = vpop.f32.mrf.mxu0
  %v851 = vadd.f32 %v755, %v850
  %v852 = vpop.f32.mrf.mxu0
  %853 = vmatprep.mubr.f32.mxu0 0.0
  %854 = vmatmul.mubr.f32.gmra.mxu0 %v774
  %v855 = vpop.f32.mrf.mxu0
  %v856 = vadd.f32 %v760, %v855
  %v857 = vpop.f32.mrf.mxu0
  %858 = vmatprep.mubr.f32.mxu0 0.0
  %859 = vmatmul.mubr.f32.gmra.mxu0 %v777
  %v860 = vpop.f32.mrf.mxu0
  %v861 = vadd.f32 %v765, %v860
  %v862 = vpop.f32.mrf.mxu0
  %863 = vdwg.mxu0
  %v864 = vld [vmem:[%s6] sm:$0xff]
  %v865 = vld [vmem:[%s6 + $0x8] sm:$0xff]
  %v866 = vld [vmem:[%s6 + $0x10] sm:$0xff]
  %v867 = vld [vmem:[%s6 + $0x18] sm:$0xff]
  %v868 = vld [vmem:[%s6 + $0x20] sm:$0xff]
  %v869 = vld [vmem:[%s6 + $0x28] sm:$0xff]
  %v870 = vld [vmem:[%s7] sm:$0xff]
  %v871 = vld [vmem:[%s7 + $0x8] sm:$0xff]
  %v872 = vld [vmem:[%s7 + $0x10] sm:$0xff]
  %v873 = vld [vmem:[%s7 + $0x18] sm:$0xff]
  %v874 = vld [vmem:[%s7 + $0x20] sm:$0xff]
  %v875 = vld [vmem:[%s7 + $0x28] sm:$0xff]
  %877 = vset.pattern.permute.xlu0 0
  %878 = vperm.xlu0 %877, %v870
  %v879 = vpop.permute.xlu0 %878
  %882 = vset.pattern.permute.xlu0 0
  %883 = vperm.xlu0 %882, %v871
  %v884 = vpop.permute.xlu0 %883
  %887 = vset.pattern.permute.xlu0 0
  %888 = vperm.xlu0 %887, %v872
  %v889 = vpop.permute.xlu0 %888
  %892 = vset.pattern.permute.xlu0 0
  %893 = vperm.xlu0 %892, %v873
  %v894 = vpop.permute.xlu0 %893
  %897 = vset.pattern.permute.xlu0 0
  %898 = vperm.xlu0 %897, %v874
  %v899 = vpop.permute.xlu0 %898
  %902 = vset.pattern.permute.xlu0 0
  %903 = vperm.xlu0 %902, %v875
  %v904 = vpop.permute.xlu0 %903
  %vm906 = vcmask 261120
  %v908 = vsel %vm906, %v864, 0
  %v911 = vsel %vm906, %v865, 0
  %v914 = vsel %vm906, %v866, 0
  %v917 = vsel %vm906, %v867, 0
  %v920 = vsel %vm906, %v868, 0
  %v923 = vsel %vm906, %v869, 0
  %925 = vmatprep.subr.mxu0 0.0
  %926 = vmatpush1.msra.mxu0 0.0
  %927 = vmatprep.subr.mxu0 0.0
  %928 = vmatpush1.msra.mxu0 0.0
  %929 = vmatprep.subr.mxu0 0.0
  %930 = vmatpush1.msra.mxu0 0.0
  %931 = vmatprep.subr.mxu0 0.0
  %932 = vmatpush1.msra.mxu0 0.0
  %933 = vmatprep.subr.mxu0 0.0
  %934 = vmatpush1.msra.mxu0 0.0
  %935 = vmatprep.subr.mxu0 0.0
  %936 = vmatpush1.msra.mxu0 0.0
  %937 = vmatprep.subr.mxu0 0.0
  %938 = vmatpush1.msra.mxu0 0.0
  %939 = vmatprep.subr.mxu0 0.0
  %940 = vmatpush1.msra.mxu0 0.0
  %941 = vmatprep.subr.mxu0 0.0
  %942 = vmatpush1.msra.mxu0 0.0
  %943 = vmatprep.subr.mxu0 0.0
  %944 = vmatpush1.msra.mxu0 0.0
  %945 = vmatprep.subr.mxu0 0.0
  %946 = vmatpush1.msra.mxu0 0.0
  %947 = vmatprep.subr.mxu0 0.0
  %948 = vmatpush1.msra.mxu0 0.0
  %949 = vmatprep.subr.mxu0 0.0
  %950 = vmatpush1.msra.mxu0 %v861
  %951 = vmatprep.subr.mxu0 0.0
  %952 = vmatpush1.msra.mxu0 %v856
  %953 = vmatprep.subr.mxu0 0.0
  %954 = vmatpush1.msra.mxu0 %v851
  %955 = vmatprep.subr.mxu0 0.0
  %956 = vmatpush1.msra.mxu0 %v846
  %957 = vmatprep.subr.mxu0 0.0
  %958 = vmatpush2.msra.mxu0 0.0
  %959 = vmatprep.subr.mxu0 0.0
  %960 = vmatpush2.msra.mxu0 0.0
  %961 = vmatprep.subr.mxu0 0.0
  %962 = vmatpush2.msra.mxu0 0.0
  %963 = vmatprep.subr.mxu0 0.0
  %964 = vmatpush2.msra.mxu0 0.0
  %965 = vmatprep.subr.mxu0 0.0
  %966 = vmatpush2.msra.mxu0 0.0
  %967 = vmatprep.subr.mxu0 0.0
  %968 = vmatpush2.msra.mxu0 0.0
  %969 = vmatprep.subr.mxu0 0.0
  %970 = vmatpush2.msra.mxu0 0.0
  %971 = vmatprep.subr.mxu0 0.0
  %972 = vmatpush2.msra.mxu0 0.0
  %973 = vmatprep.subr.mxu0 0.0
  %974 = vmatpush2.msra.mxu0 0.0
  %975 = vmatprep.subr.mxu0 0.0
  %976 = vmatpush2.msra.mxu0 0.0
  %977 = vmatprep.subr.mxu0 0.0
  %978 = vmatpush2.msra.mxu0 0.0
  %979 = vmatprep.subr.mxu0 0.0
  %980 = vmatpush2.msra.mxu0 0.0
  %981 = vmatprep.subr.mxu0 0.0
  %982 = vmatpush2.msra.mxu0 0.0
  %983 = vmatprep.subr.mxu0 0.0
  %984 = vmatpush2.msra.mxu0 0.0
  %985 = vmatprep.subr.mxu0 0.0
  %986 = vmatpush2.msra.mxu0 0.0
  %987 = vmatprep.subr.mxu0 0.0
  %988 = vmatpush2.msra.mxu0 0.0
  %989 = vmatprep.mubr.f32.mxu0 0.0
  %990 = vmatmul.mubr.f32.gmra.mxu0 %v908
  %v991 = vpop.f32.mrf.mxu0
  %v992 = vadd.f32 %v879, %v991
  %v993 = vpop.f32.mrf.mxu0
  %994 = vmatprep.mubr.f32.mxu0 0.0
  %995 = vmatmul.mubr.f32.gmra.mxu0 %v911
  %v996 = vpop.f32.mrf.mxu0
  %v997 = vadd.f32 %v884, %v996
  %v998 = vpop.f32.mrf.mxu0
  %999 = vmatprep.mubr.f32.mxu0 0.0
  %1000 = vmatmul.mubr.f32.gmra.mxu0 %v914
  %v1001 = vpop.f32.mrf.mxu0
  %v1002 = vadd.f32 %v889, %v1001
  %v1003 = vpop.f32.mrf.mxu0
  %1004 = vmatprep.mubr.f32.mxu0 0.0
  %1005 = vmatmul.mubr.f32.gmra.mxu0 %v917
  %v1006 = vpop.f32.mrf.mxu0
  %v1007 = vadd.f32 %v894, %v1006
  %v1008 = vpop.f32.mrf.mxu0
  %1009 = vmatprep.mubr.f32.mxu0 0.0
  %1010 = vmatmul.mubr.f32.gmra.mxu0 %v920
  %v1011 = vpop.f32.mrf.mxu0
  %v1012 = vadd.f32 %v899, %v1011
  %v1013 = vpop.f32.mrf.mxu0
  %1014 = vmatprep.mubr.f32.mxu0 0.0
  %1015 = vmatmul.mubr.f32.gmra.mxu0 %v923
  %v1016 = vpop.f32.mrf.mxu0
  %v1017 = vadd.f32 %v904, %v1016
  %v1018 = vpop.f32.mrf.mxu0
  %1019 = vdwg.mxu0
  %v1020 = vmax.f32 %v992, %v1002
  %v1021 = vmax.f32 %v997, %v1007
  %v1022 = vmax.f32 %v1020, %v1012
  %v1023 = vmax.f32 %v1021, %v1017
  %v1024 = vsub.f32 %v992, %v1022
  %v1025 = vsub.f32 %v997, %v1023
  %v1026 = vmul.f32 %v1024, 1.442695
  %v1027 = vpow.pop %v1026
  %v1028 = vmul.f32 %v1025, 1.442695
  %v1029 = vpow.pop %v1028
  %v1030 = vsub.f32 %v1002, %v1022
  %v1031 = vsub.f32 %v1007, %v1023
  %v1032 = vmul.f32 %v1030, 1.442695
  %v1033 = vpow.pop %v1032
  %v1034 = vmul.f32 %v1031, 1.442695
  %v1035 = vpow.pop %v1034
  %v1036 = vsub.f32 %v1012, %v1022
  %v1037 = vsub.f32 %v1017, %v1023
  %v1038 = vmul.f32 %v1036, 1.442695
  %v1039 = vpow.pop %v1038
  %v1040 = vmul.f32 %v1037, 1.442695
  %v1041 = vpow.pop %v1040
  %v1042 = vadd.f32 %v1027, %v1033
  %v1043 = vadd.f32 %v1029, %v1035
  %v1044 = vadd.f32 %v1042, %v1039
  %v1045 = vadd.f32 %v1043, %v1041
  %v1046 = vrcp.pop %v1044
  %v1047 = vrcp.pop %v1045
  %v1048 = vmul.f32 %v1027, %v1046
  %v1049 = vmul.f32 %v1029, %v1047
  %v1050 = vmul.f32 %v1033, %v1046
  %v1051 = vmul.f32 %v1035, %v1047
  %v1052 = vmul.f32 %v1039, %v1046
  %v1053 = vmul.f32 %v1041, %v1047
  %v1054 = vld [vmem:[%s8] sm:$0xff]
  %v1055 = vld [vmem:[%s8 + $0x8] sm:$0xff]
  %v1056 = vld [vmem:[%s9] sm:$0xff]
  %v1057 = vld [vmem:[%s9 + $0x8] sm:$0xff]
  %1059 = vset.pattern.permute.xlu0 0
  %1060 = vperm.xlu0 %1059, %v1048
  %v1061 = vpop.permute.xlu0 %1060
  %1064 = vset.pattern.permute.xlu0 0
  %1065 = vperm.xlu0 %1064, %v1049
  %v1066 = vpop.permute.xlu0 %1065
  %v1068 = vmul.f32 %v1061, %v457
  %v1069 = vmul.f32 %v1061, %v458
  %v1070 = vmul.f32 %v1066, %v461
  %v1071 = vmul.f32 %v1066, %v462
  %1073 = vset.pattern.permute.xlu0 0
  %1074 = vperm.xlu0 %1073, %v1050
  %v1075 = vpop.permute.xlu0 %1074
  %1078 = vset.pattern.permute.xlu0 0
  %1079 = vperm.xlu0 %1078, %v1051
  %v1080 = vpop.permute.xlu0 %1079
  %v1082 = vmul.f32 %v1075, %v465
  %v1083 = vmul.f32 %v1075, %v466
  %v1084 = vmul.f32 %v1080, %v469
  %v1085 = vmul.f32 %v1080, %v470
  %v1086 = vadd.f32 %v1068, %v1082
  %v1087 = vadd.f32 %v1069, %v1083
  %v1088 = vadd.f32 %v1070, %v1084
  %v1089 = vadd.f32 %v1071, %v1085
  %1091 = vset.pattern.permute.xlu0 0
  %1092 = vperm.xlu0 %1091, %v1052
  %v1093 = vpop.permute.xlu0 %1092
  %1096 = vset.pattern.permute.xlu0 0
  %1097 = vperm.xlu0 %1096, %v1053
  %v1098 = vpop.permute.xlu0 %1097
  %v1100 = vmul.f32 %v1093, %v473
  %v1101 = vmul.f32 %v1093, %v474
  %v1102 = vmul.f32 %v1098, %v477
  %v1103 = vmul.f32 %v1098, %v478
  %v1104 = vadd.f32 %v1086, %v1100
  %v1105 = vadd.f32 %v1087, %v1101
  %v1106 = vadd.f32 %v1088, %v1102
  %v1107 = vadd.f32 %v1089, %v1103
  %1109 = vset.pattern.permute.xlu0 0
  %1110 = vperm.xlu0 %1109, %v1054
  %v1111 = vpop.permute.xlu0 %1110
  %1114 = vset.pattern.permute.xlu0 0
  %1115 = vperm.xlu0 %1114, %v1055
  %v1116 = vpop.permute.xlu0 %1115
  %v1118 = vmul.f32 %v1104, %v1111
  %v1119 = vmul.f32 %v1105, %v1111
  %v1120 = vmul.f32 %v1106, %v1116
  %v1121 = vmul.f32 %v1107, %v1116
  %1123 = vset.pattern.permute.xlu0 0
  %1124 = vperm.xlu0 %1123, %v1056
  %v1125 = vpop.permute.xlu0 %1124
  %1128 = vset.pattern.permute.xlu0 0
  %1129 = vperm.xlu0 %1128, %v1057
  %v1130 = vpop.permute.xlu0 %1129
  %v1132 = vadd.f32 %v1118, %v1125
  %v1133 = vadd.f32 %v1119, %v1125
  %v1134 = vadd.f32 %v1120, %v1130
  %v1135 = vadd.f32 %v1121, %v1130
  %v1136 = vxor.u32 %v1132, 2147483648
  %v1137 = vxor.u32 %v1133, 2147483648
  %v1138 = vxor.u32 %v1134, 2147483648
  %v1139 = vxor.u32 %v1135, 2147483648
  %v1140 = vmul.f32 %v1136, 1.442695
  %v1141 = vpow.pop %v1140
  %v1142 = vmul.f32 %v1137, 1.442695
  %v1143 = vpow.pop %v1142
  %v1144 = vmul.f32 %v1138, 1.442695
  %v1145 = vpow.pop %v1144
  %v1146 = vmul.f32 %v1139, 1.442695
  %v1147 = vpow.pop %v1146
  %v1148 = vadd.f32 %v1141, 1.0
  %v1149 = vadd.f32 %v1143, 1.0
  %v1150 = vadd.f32 %v1145, 1.0
  %v1151 = vadd.f32 %v1147, 1.0
  %v1152 = vrcp.pop %v1148
  %v1153 = vmul.f32 1.0, %v1152
  %v1154 = vrcp.pop %v1149
  %v1155 = vmul.f32 1.0, %v1154
  %v1156 = vrcp.pop %v1150
  %v1157 = vmul.f32 1.0, %v1156
  %v1158 = vrcp.pop %v1151
  %v1159 = vmul.f32 1.0, %v1158
  %1160 = vst [vmem:[%s10] sm:$0xff] %v1153
  %1161 = vst [vmem:[%s10 + $0x8] sm:$0xff] %v1155
  %1162 = vst [vmem:[%s10 + $0x10] sm:$0xff] %v1157
  %1163 = vst [vmem:[%s10 + $0x18] sm:$0xff] %v1159
  %1164 = vset.pattern.permute.xlu0 1
  %1165 = vperm.xlu0 %1164, %v1048
  %v1166 = vpop.permute.xlu0 %1165
  %1168 = vset.pattern.permute.xlu0 1
  %1169 = vperm.xlu0 %1168, %v1049
  %v1170 = vpop.permute.xlu0 %1169
  %v1172 = vmul.f32 %v1166, %v459
  %v1173 = vmul.f32 %v1166, %v460
  %v1174 = vmul.f32 %v1170, %v463
  %v1175 = vmul.f32 %v1170, %v464
  %1176 = vset.pattern.permute.xlu0 1
  %1177 = vperm.xlu0 %1176, %v1050
  %v1178 = vpop.permute.xlu0 %1177
  %1180 = vset.pattern.permute.xlu0 1
  %1181 = vperm.xlu0 %1180, %v1051
  %v1182 = vpop.permute.xlu0 %1181
  %v1184 = vmul.f32 %v1178, %v467
  %v1185 = vmul.f32 %v1178, %v468
  %v1186 = vmul.f32 %v1182, %v471
  %v1187 = vmul.f32 %v1182, %v472
  %v1188 = vadd.f32 %v1172, %v1184
  %v1189 = vadd.f32 %v1173, %v1185
  %v1190 = vadd.f32 %v1174, %v1186
  %v1191 = vadd.f32 %v1175, %v1187
  %1192 = vset.pattern.permute.xlu0 1
  %1193 = vperm.xlu0 %1192, %v1052
  %v1194 = vpop.permute.xlu0 %1193
  %1196 = vset.pattern.permute.xlu0 1
  %1197 = vperm.xlu0 %1196, %v1053
  %v1198 = vpop.permute.xlu0 %1197
  %v1200 = vmul.f32 %v1194, %v475
  %v1201 = vmul.f32 %v1194, %v476
  %v1202 = vmul.f32 %v1198, %v479
  %v1203 = vmul.f32 %v1198, %v480
  %v1204 = vadd.f32 %v1188, %v1200
  %v1205 = vadd.f32 %v1189, %v1201
  %v1206 = vadd.f32 %v1190, %v1202
  %v1207 = vadd.f32 %v1191, %v1203
  %v1208 = vmul.f32 %v1204, %v1111
  %v1209 = vmul.f32 %v1205, %v1111
  %v1210 = vmul.f32 %v1206, %v1116
  %v1211 = vmul.f32 %v1207, %v1116
  %v1212 = vadd.f32 %v1208, %v1125
  %v1213 = vadd.f32 %v1209, %v1125
  %v1214 = vadd.f32 %v1210, %v1130
  %v1215 = vadd.f32 %v1211, %v1130
  %v1216 = vxor.u32 %v1212, 2147483648
  %v1217 = vxor.u32 %v1213, 2147483648
  %v1218 = vxor.u32 %v1214, 2147483648
  %v1219 = vxor.u32 %v1215, 2147483648
  %v1220 = vmul.f32 %v1216, 1.442695
  %v1221 = vpow.pop %v1220
  %v1222 = vmul.f32 %v1217, 1.442695
  %v1223 = vpow.pop %v1222
  %v1224 = vmul.f32 %v1218, 1.442695
  %v1225 = vpow.pop %v1224
  %v1226 = vmul.f32 %v1219, 1.442695
  %v1227 = vpow.pop %v1226
  %v1228 = vadd.f32 %v1221, 1.0
  %v1229 = vadd.f32 %v1223, 1.0
  %v1230 = vadd.f32 %v1225, 1.0
  %v1231 = vadd.f32 %v1227, 1.0
  %v1232 = vrcp.pop %v1228
  %v1233 = vmul.f32 1.0, %v1232
  %v1234 = vrcp.pop %v1229
  %v1235 = vmul.f32 1.0, %v1234
  %v1236 = vrcp.pop %v1230
  %v1237 = vmul.f32 1.0, %v1236
  %v1238 = vrcp.pop %v1231
  %v1239 = vmul.f32 1.0, %v1238
  %s1240 = scalar_lea.vmem %s10, 32
  %1241 = vst [vmem:[%s1240] sm:$0xff] %v1233
  %1242 = vst [vmem:[%s1240 + $0x8] sm:$0xff] %v1235
  %1243 = vst [vmem:[%s1240 + $0x10] sm:$0xff] %v1237
  %1244 = vst [vmem:[%s1240 + $0x18] sm:$0xff] %v1239
  // Predicated region
  $region42: #{basic_block2_forward.1} parent=0 // pred_check
    _
  $region43: #{basic_block2_forward.1} parent=0 // pred_check_branch
    %1246 = sbr.rel (0) target = $region45
  $region44: #{basic_block2_forward.1} parent=0 // pred_region
    _
  $region45: #{basic_block2_forward.1} parent=0 // pred_fallthru
    _
  // Predicated region
  $region46: #{basic_block2_forward.1} parent=0 // pred_check
    _
  $region47: #{basic_block2_forward.1} parent=0 // pred_check_branch
    %1248 = sbr.rel (0) target = $region49
  $region48: #{basic_block2_forward.1} parent=0 // pred_region
    _
  $region49: #{basic_block2_forward.1} parent=0 // pred_fallthru
    _

</llo_original>
